<compile_context>
chip_gen: v7x
topology: tpu7x:2x2x1
jax: 0.10.0
libtpu: 0.0.40
codegen_flags: <defaults>
</compile_context>

<pallas_src>
from functools import partial

import jax
import jax.numpy as jnp
from jax import lax
from jax.experimental import pallas as pl
from jax.experimental.pallas import tpu as pltpu


# Scoped-VMEM budget: above the 16/32 MiB defaults, safely under v7x's 64 MiB physical.
_VMEM_LIMIT = 48 * 1024 * 1024


# ---------------------------------------------------------------------------
# Tiling helper
# ---------------------------------------------------------------------------

def _pick_tile(dim, target, align):
    """Largest tile <= target that is a multiple of `align` and divides `dim`;
    falls back to the full dim (always legal for BlockSpec)."""
    if dim <= target:
        return dim
    t = (target // align) * align
    while t >= align:
        if dim % t == 0:
            return t
        t -= align
    return dim


def _cparams(semantics):
    return pltpu.CompilerParams(dimension_semantics=semantics,
                                vmem_limit_bytes=_VMEM_LIMIT)


# ---------------------------------------------------------------------------
# Pallas kernels
# ---------------------------------------------------------------------------

def _linear_kernel(x_ref, w_ref, b_ref, o_ref, acc_ref):
    """Tiled matmul + bias: K-reduction over grid axis 2, f32 accumulator."""
    @pl.when(pl.program_id(2) == 0)
    def _():
        acc_ref[...] = jnp.zeros_like(acc_ref)

    acc_ref[...] += jnp.dot(x_ref[...], w_ref[...],
                            preferred_element_type=jnp.float32)

    @pl.when(pl.program_id(2) == pl.num_programs(2) - 1)
    def _():
        o_ref[...] = (acc_ref[...] + b_ref[...].astype(jnp.float32)
                      ).astype(o_ref.dtype)


def _linear_res_kernel(x_ref, w_ref, b_ref, res_ref, o_ref, acc_ref):
    """Same as _linear_kernel, with the residual add fused into the finalize."""
    @pl.when(pl.program_id(2) == 0)
    def _():
        acc_ref[...] = jnp.zeros_like(acc_ref)

    acc_ref[...] += jnp.dot(x_ref[...], w_ref[...],
                            preferred_element_type=jnp.float32)

    @pl.when(pl.program_id(2) == pl.num_programs(2) - 1)
    def _():
        o_ref[...] = (acc_ref[...] + b_ref[...].astype(jnp.float32)
                      + res_ref[...].astype(jnp.float32)).astype(o_ref.dtype)


def linear(x2d, w, b, residual=None, out_dtype=None):
    """y = x @ w + b (+ residual). x2d: (M, K), w: (K, N), b: (N,)."""
    M, K = x2d.shape
    N = w.shape[1]
    out_dtype = x2d.dtype if out_dtype is None else out_dtype
    tm = _pick_tile(M, 512, 16)
    tn = _pick_tile(N, 256, 128)
    tk = _pick_tile(K, 1024, 128)
    b2 = b.reshape(1, N)
    grid = (M // tm, N // tn, K // tk)
    x_spec = pl.BlockSpec((tm, tk), lambda i, j, k: (i, k))
    w_spec = pl.BlockSpec((tk, tn), lambda i, j, k: (k, j))
    b_spec = pl.BlockSpec((1, tn), lambda i, j, k: (0, j))
    o_spec = pl.BlockSpec((tm, tn), lambda i, j, k: (i, j))
    cp = _cparams(("parallel", "parallel", "arbitrary"))
    scratch = [pltpu.VMEM((tm, tn), jnp.float32)]
    if residual is None:
        return pl.pallas_call(
            _linear_kernel,
            out_shape=jax.ShapeDtypeStruct((M, N), out_dtype),
            grid=grid,
            in_specs=[x_spec, w_spec, b_spec],
            out_specs=o_spec,
            scratch_shapes=scratch,
            compiler_params=cp,
        )(x2d, w, b2)
    r_spec = pl.BlockSpec((tm, tn), lambda i, j, k: (i, j))
    return pl.pallas_call(
        _linear_res_kernel,
        out_shape=jax.ShapeDtypeStruct((M, N), out_dtype),
        grid=grid,
        in_specs=[x_spec, w_spec, b_spec, r_spec],
        out_specs=o_spec,
        scratch_shapes=scratch,
        compiler_params=cp,
    )(x2d, w, b2, residual)


def _norm_linear_kernel(x_ref, g_ref, w_ref, b_ref, o_ref, xn_sc, *, eps):
    """RMSNorm hoisted out of the N-tile loop: computed once per M tile (j == 0)
    into a VMEM scratch, then reused for every N tile."""
    @pl.when(pl.program_id(1) == 0)
    def _():
        x = x_ref[...].astype(jnp.float32)
        ms = jnp.mean(x * x, axis=-1, keepdims=True)
        xn_sc[...] = (x * lax.rsqrt(ms + eps)
                      * g_ref[...].astype(jnp.float32)).astype(xn_sc.dtype)

    acc = jnp.dot(xn_sc[...], w_ref[...], preferred_element_type=jnp.float32)
    o_ref[...] = (acc + b_ref[...].astype(jnp.float32)).astype(o_ref.dtype)


def fused_norm_linear(x2d, norm_w, w, b, out_dtype=None, eps=1e-5):
    """y = rmsnorm(x) @ w + b. x2d: (M, K), w: (K, N)."""
    M, K = x2d.shape
    N = w.shape[1]
    out_dtype = x2d.dtype if out_dtype is None else out_dtype
    tm = _pick_tile(M, 256, 16)
    tn = _pick_tile(N, 256, 128)
    g2 = norm_w.reshape(1, K)
    b2 = b.reshape(1, N)
    return pl.pallas_call(
        partial(_norm_linear_kernel, eps=eps),
        out_shape=jax.ShapeDtypeStruct((M, N), out_dtype),
        grid=(M // tm, N // tn),
        in_specs=[
            pl.BlockSpec((tm, K), lambda i, j: (i, 0)),
            pl.BlockSpec((1, K), lambda i, j: (0, 0)),
            pl.BlockSpec((K, tn), lambda i, j: (0, j)),
            pl.BlockSpec((1, tn), lambda i, j: (0, j)),
        ],
        out_specs=pl.BlockSpec((tm, tn), lambda i, j: (i, j)),
        scratch_shapes=[pltpu.VMEM((tm, K), w.dtype)],
        compiler_params=_cparams(("parallel", "arbitrary")),
    )(x2d, g2, w, b2)


def _norm_swiglu_kernel(x_ref, g_ref, wa_ref, ba_ref, wg_ref, bg_ref, o_ref,
                        xn_sc, *, eps):
    """rmsnorm(x) (hoisted) -> a = x@wa+ba, g = x@wg+bg -> silu(a) * g."""
    @pl.when(pl.program_id(1) == 0)
    def _():
        x = x_ref[...].astype(jnp.float32)
        ms = jnp.mean(x * x, axis=-1, keepdims=True)
        xn_sc[...] = (x * lax.rsqrt(ms + eps)
                      * g_ref[...].astype(jnp.float32)).astype(xn_sc.dtype)

    xn = xn_sc[...]
    a = jnp.dot(xn, wa_ref[...], preferred_element_type=jnp.float32)
    a = a + ba_ref[...].astype(jnp.float32)
    g = jnp.dot(xn, wg_ref[...], preferred_element_type=jnp.float32)
    g = g + bg_ref[...].astype(jnp.float32)
    o_ref[...] = (a * jax.nn.sigmoid(a) * g).astype(o_ref.dtype)


def fused_norm_swiglu(x2d, norm_w, wa, ba, wg, bg, out_dtype=None, eps=1e-5):
    """SwiGLU MLP first half: silu(rmsnorm(x)@wa+ba) * (rmsnorm(x)@wg+bg)."""
    M, K = x2d.shape
    Hm = wa.shape[1]
    out_dtype = x2d.dtype if out_dtype is None else out_dtype
    tm = _pick_tile(M, 256, 16)
    tn = _pick_tile(Hm, 256, 128)
    g2 = norm_w.reshape(1, K)
    ba2 = ba.reshape(1, Hm)
    bg2 = bg.reshape(1, Hm)
    return pl.pallas_call(
        partial(_norm_swiglu_kernel, eps=eps),
        out_shape=jax.ShapeDtypeStruct((M, Hm), out_dtype),
        grid=(M // tm, Hm // tn),
        in_specs=[
            pl.BlockSpec((tm, K), lambda i, j: (i, 0)),
            pl.BlockSpec((1, K), lambda i, j: (0, 0)),
            pl.BlockSpec((K, tn), lambda i, j: (0, j)),
            pl.BlockSpec((1, tn), lambda i, j: (0, j)),
            pl.BlockSpec((K, tn), lambda i, j: (0, j)),
            pl.BlockSpec((1, tn), lambda i, j: (0, j)),
        ],
        out_specs=pl.BlockSpec((tm, tn), lambda i, j: (i, j)),
        scratch_shapes=[pltpu.VMEM((tm, K), wa.dtype)],
        compiler_params=_cparams(("parallel", "arbitrary")),
    )(x2d, g2, wa, ba2, wg, bg2)


def _embed_pos_kernel(x_ref, w_ref, b_ref, pos_ref, o_ref):
    """Patch embedding with the positional embedding fused into the epilogue."""
    x = x_ref[0].astype(w_ref.dtype)
    acc = jnp.dot(x, w_ref[...], preferred_element_type=jnp.float32)
    o_ref[0] = (acc + b_ref[...].astype(jnp.float32)
                + pos_ref[...].astype(jnp.float32)).astype(o_ref.dtype)


def patch_embed_pos(patches, w, b, pos, out_dtype=jnp.bfloat16):
    """patches: (B, N, P) f32, w: (P, E), b: (E,), pos: (N, E) -> (B, N, E)."""
    B, N, P = patches.shape
    E = w.shape[1]
    tm = _pick_tile(N, 256, 16)
    tn = _pick_tile(E, 256, 128)
    b2 = b.reshape(1, E)
    return pl.pallas_call(
        _embed_pos_kernel,
        out_shape=jax.ShapeDtypeStruct((B, N, E), out_dtype),
        grid=(B, N // tm, E // tn),
        in_specs=[
            pl.BlockSpec((1, tm, P), lambda bb, i, j: (bb, i, 0)),
            pl.BlockSpec((P, tn), lambda bb, i, j: (0, j)),
            pl.BlockSpec((1, tn), lambda bb, i, j: (0, j)),
            pl.BlockSpec((tm, tn), lambda bb, i, j: (i, j)),
        ],
        out_specs=pl.BlockSpec((1, tm, tn), lambda bb, i, j: (bb, i, j)),
        compiler_params=_cparams(("parallel", "parallel", "parallel")),
    )(patches, w, b2, pos)


def _flash_attn_kernel(q_ref, k_ref, v_ref, o_ref, m_sc, l_sc, acc_sc,
                       *, num_heads, scale):
    """Flash-style online-softmax attention operating directly on the packed
    (B, S, E) layout. Heads are split in-kernel with lane-aligned static slices;
    the accumulator is a single lane-dense (tq, E) scratch; output is (1, tq, E)."""
    ki = pl.program_id(2)

    @pl.when(ki == 0)
    def _():
        m_sc[...] = jnp.full(m_sc.shape, -jnp.inf, jnp.float32)
        l_sc[...] = jnp.zeros(l_sc.shape, jnp.float32)
        acc_sc[...] = jnp.zeros(acc_sc.shape, jnp.float32)

    q = q_ref[0]                                   # (tq, E) bf16
    k = k_ref[0]                                   # (tk, E)
    v = v_ref[0]                                   # (tk, E)
    dh = q.shape[-1] // num_heads

    for h in range(num_heads):
        sl = slice(h * dh, (h + 1) * dh)
        qh, kh, vh = q[:, sl], k[:, sl], v[:, sl]
        s = lax.dot_general(qh, kh, (((1,), (1,)), ((), ())),
                            preferred_element_type=jnp.float32) * scale   # (tq, tk)
        m_prev = m_sc[h]                                                  # (tq, 1)
        m_new = jnp.maximum(m_prev, jnp.max(s, axis=-1, keepdims=True))
        alpha = jnp.exp(m_prev - m_new)
        p = jnp.exp(s - m_new)
        l_sc[h] = alpha * l_sc[h] + jnp.sum(p, axis=-1, keepdims=True)
        acc_sc[:, sl] = alpha * acc_sc[:, sl] + jnp.dot(
            p.astype(vh.dtype), vh, preferred_element_type=jnp.float32)
        m_sc[h] = m_new

    @pl.when(ki == pl.num_programs(2) - 1)
    def _():
        outs = []
        for h in range(num_heads):
            sl = slice(h * dh, (h + 1) * dh)
            inv = pl.reciprocal(l_sc[h], approx=True)
            outs.append(acc_sc[:, sl] * inv)
        o_ref[0] = jnp.concatenate(outs, axis=-1).astype(o_ref.dtype)


def flash_mha_packed(qkv, num_heads):
    """qkv: (B, S, 3E) packed [q | k | v] slab -> attention output (B, S, E).
    Q/K/V are sliced straight out of the slab via BlockSpec block indices."""
    B, S, E3 = qkv.shape
    E = E3 // 3
    dh = E // num_heads
    scale = float(dh) ** -0.5
    tq = _pick_tile(S, 256, 16)
    tk = _pick_tile(S, 256, 16)
    return pl.pallas_call(
        partial(_flash_attn_kernel, num_heads=num_heads, scale=scale),
        out_shape=jax.ShapeDtypeStruct((B, S, E), qkv.dtype),
        grid=(B, S // tq, S // tk),
        in_specs=[
            pl.BlockSpec((1, tq, E), lambda b, qi, ki: (b, qi, 0)),   # Q slab
            pl.BlockSpec((1, tk, E), lambda b, qi, ki: (b, ki, 1)),   # K slab
            pl.BlockSpec((1, tk, E), lambda b, qi, ki: (b, ki, 2)),   # V slab
        ],
        out_specs=pl.BlockSpec((1, tq, E), lambda b, qi, ki: (b, qi, 0)),
        scratch_shapes=[
            pltpu.VMEM((num_heads, tq, 1), jnp.float32),
            pltpu.VMEM((num_heads, tq, 1), jnp.float32),
            pltpu.VMEM((tq, E), jnp.float32),
        ],
        compiler_params=_cparams(("parallel", "parallel", "arbitrary")),
    )(qkv, qkv, qkv)


def _mse_sum_kernel(t_ref, p_ref, o_ref, acc_sc):
    @pl.when(pl.program_id(0) == 0)
    def _():
        acc_sc[...] = jnp.zeros_like(acc_sc)

    d = t_ref[...].astype(jnp.float32) - p_ref[...].astype(jnp.float32)
    per_row = jnp.mean(d * d, axis=-1, keepdims=True)          # (tm, 1)
    acc_sc[...] += jnp.sum(per_row).reshape(1, 1)

    @pl.when(pl.program_id(0) == pl.num_programs(0) - 1)
    def _():
        o_ref[...] = acc_sc[...]


def masked_mse_sum(targets2d, preds2d):
    """Sum over rows of mean((t - p)^2, axis=-1); partial sums in VMEM scratch,
    (1,1) output stored only at the last grid step."""
    M, P = targets2d.shape
    tm = _pick_tile(M, 1024, 16)
    out = pl.pallas_call(
        _mse_sum_kernel,
        out_shape=jax.ShapeDtypeStruct((1, 1), jnp.float32),
        grid=(M // tm,),
        in_specs=[
            pl.BlockSpec((tm, P), lambda i: (i, 0)),
            pl.BlockSpec((tm, P), lambda i: (i, 0)),
        ],
        out_specs=pl.BlockSpec((1, 1), lambda i: (0, 0)),
        scratch_shapes=[pltpu.VMEM((1, 1), jnp.float32)],
        compiler_params=_cparams(("arbitrary",)),
    )(targets2d, preds2d)
    return out[0, 0]


# ---------------------------------------------------------------------------
# Model glue (plain JAX): patchify, masking, transformer composition
# ---------------------------------------------------------------------------

def patchify(x, p_lat, p_ax):
    B, Z, Y, X, C = x.shape
    x = x.reshape(B, Z // p_ax, p_ax, Y // p_lat, p_lat, X // p_lat, p_lat, C)
    x = jnp.transpose(x, (0, 1, 3, 5, 2, 4, 6, 7))
    n = (Z // p_ax) * (Y // p_lat) * (X // p_lat)
    return x.reshape(B, n, p_ax * p_lat * p_lat * C)


def mask_random_patches(key, batch, num_patches, ratio):
    num_keep = max(1, int(round(num_patches * (1.0 - ratio))))
    keys = jax.random.split(key, batch)
    ids_shuffle = jax.vmap(
        lambda k: jax.random.permutation(k, num_patches))(keys).astype(jnp.int32)
    ids_restore = jnp.argsort(ids_shuffle, axis=1).astype(jnp.int32)
    context_idx = ids_shuffle[:, :num_keep]                         # visible
    target_idx = ids_shuffle[:, num_keep:]                          # masked
    masks_sorted = jnp.concatenate(
        [jnp.zeros((batch, num_keep), jnp.float32),
         jnp.ones((batch, num_patches - num_keep), jnp.float32)], axis=1)
    masks = jnp.take_along_axis(masks_sorted, ids_restore, axis=1)  # 1 == masked
    return masks, context_idx, target_idx, ids_restore


def apply_masks(x, idx):
    """Gather patches x: (B, N, D) at idx: (B, K) -> (B, K, D)."""
    return jnp.take_along_axis(x, idx[:, :, None], axis=1)


def transformer_block(x, blk, num_heads):
    B, S, E = x.shape
    x2 = x.reshape(-1, E)
    # Fused rmsnorm + qkv projection (norm hoisted across the 3E output tiles).
    qkv = fused_norm_linear(x2, blk["norm1"], blk["qkv_w"], blk["qkv_b"])   # (B*S, 3E)
    # Attention directly on the packed slab; output already in (B, S, E).
    o = flash_mha_packed(qkv.reshape(B, S, 3 * E), num_heads)               # (B, S, E)
    # proj matmul with the residual add fused into its epilogue.
    x = linear(o.reshape(-1, E), blk["proj_w"], blk["proj_b"],
               residual=x2).reshape(B, S, E)
    x2 = x.reshape(-1, E)
    h = fused_norm_swiglu(x2, blk["norm2"],
                          blk["fc1a_w"], blk["fc1a_b"],
                          blk["fc1g_w"], blk["fc1g_b"])                     # (B*S, Hm)
    # fc2 matmul with the residual add fused into its epilogue.
    x = linear(h, blk["fc2_w"], blk["fc2_b"], residual=x2).reshape(B, S, E)
    return x


def encoder_forward(enc, patches, context_idx, num_heads):
    # Patch embedding with '+ pos' fused into the matmul epilogue.
    x = patch_embed_pos(patches, enc["patch_w"], enc["patch_b"], enc["pos"])
    x = apply_masks(x, context_idx)                                 # keep context patches
    for blk in enc["blocks"]:
        x = transformer_block(x, blk, num_heads)
    # NOTE: final encoder RMSNorm is fused into the decoder-embed linear prologue.
    return x


def decoder_forward(dec, enc_norm_w, x_ctx, ids_restore, num_heads):
    B, Nc, E = x_ctx.shape
    D = dec["embed_w"].shape[1]
    N = ids_restore.shape[1]
    # Fused (encoder final norm) + decoder embed linear.
    x = fused_norm_linear(x_ctx.reshape(-1, E), enc_norm_w,
                          dec["embed_w"], dec["embed_b"]).reshape(B, Nc, D)
    mask_tok = jnp.broadcast_to(dec["mask_token"], (B, N - Nc, D))
    x = jnp.concatenate([x, mask_tok], axis=1)                      # shuffled order
    x = jnp.take_along_axis(x, ids_restore[:, :, None], axis=1)     # restore order
    # TODO(synk): decoder '+ pos' sits after a data-dependent gather; left as a cheap
    # XLA fusion with the gather rather than a separate Pallas pass.
    x = x + dec["pos"]
    for blk in dec["blocks"]:
        x = transformer_block(x, blk, num_heads)
    # Fused (decoder final norm) + prediction head; bf16 output, loss up-casts.
    P = dec["pred_w"].shape[1]
    x = fused_norm_linear(x.reshape(-1, D), dec["norm"],
                          dec["pred_w"], dec["pred_b"]).reshape(B, N, P)
    return x


def mae_forward(params, inputs, mask_key, cfg):
    patches = patchify(inputs, cfg["p_lat"], cfg["p_ax"])           # (B, N, P) f32
    B, N, P = patches.shape
    masks, context_idx, target_idx, ids_restore = mask_random_patches(
        mask_key, B, N, cfg["mask_ratio"])
    x = encoder_forward(params["enc"], patches, context_idx, cfg["num_heads"])
    x = decoder_forward(params["dec"], params["enc"]["norm"], x, ids_restore,
                        cfg["dec_num_heads"])
    targets = apply_masks(patches, target_idx)                      # (B, Nt, P) f32
    predictions = apply_masks(x, target_idx)                        # (B, Nt, P) bf16
    num = masked_mse_sum(targets.reshape(-1, P), predictions.reshape(-1, P))
    denom = jnp.maximum(jnp.sum(masks), 1.0)                        # guard /0
    return num / denom


# ---------------------------------------------------------------------------
# Deterministic parameter init (weights bf16, biases/norm gains f32)
# ---------------------------------------------------------------------------

def _winit(key, shape, std):
    return (std * jax.random.normal(key, shape, jnp.float32)).astype(jnp.bfloat16)


def _init_block(key, dim, mlp_ratio, std):
    hm = int(dim * mlp_ratio)
    ks = jax.random.split(key, 5)
    return {
        "norm1": jnp.ones((dim,), jnp.float32),
        "qkv_w": _winit(ks[0], (dim, 3 * dim), std),
        "qkv_b": jnp.zeros((3 * dim,), jnp.float32),
        "proj_w": _winit(ks[1], (dim, dim), std),
        "proj_b": jnp.zeros((dim,), jnp.float32),
        "norm2": jnp.ones((dim,), jnp.float32),
        "fc1a_w": _winit(ks[2], (dim, hm), std),
        "fc1a_b": jnp.zeros((hm,), jnp.float32),
        "fc1g_w": _winit(ks[3], (dim, hm), std),
        "fc1g_b": jnp.zeros((hm,), jnp.float32),
        "fc2_w": _winit(ks[4], (hm, dim), std),
        "fc2_b": jnp.zeros((dim,), jnp.float32),
    }


def init_params(key, cfg):
    std = cfg["init_std"]
    N, P = cfg["num_patches"], cfg["pixels_per_patch"]
    E, D = cfg["embed_dim"], cfg["dec_embed_dim"]
    keys = jax.random.split(key, 8 + cfg["depth"] + cfg["dec_depth"])
    ki = iter(keys)
    enc = {
        "patch_w": _winit(next(ki), (P, E), std),
        "patch_b": jnp.zeros((E,), jnp.float32),
        "pos": _winit(next(ki), (N, E), std),            # (N, E): fused into embed epilogue
        "blocks": [_init_block(next(ki), E, cfg["mlp_ratio"], std)
                   for _ in range(cfg["depth"])],
        "norm": jnp.ones((E,), jnp.float32),
    }
    dec = {
        "embed_w": _winit(next(ki), (E, D), std),
        "embed_b": jnp.zeros((D,), jnp.float32),
        "mask_token": _winit(next(ki), (1, 1, D), std),
        "pos": _winit(next(ki), (1, N, D), std),
        "blocks": [_init_block(next(ki), D, cfg["mlp_ratio"], std)
                   for _ in range(cfg["dec_depth"])],
        "norm": jnp.ones((D,), jnp.float32),
        "pred_w": _winit(next(ki), (D, P), std),
        "pred_b": jnp.zeros((P,), jnp.float32),
    }
    return {"enc": enc, "dec": dec}


# ---------------------------------------------------------------------------
# Main
# ---------------------------------------------------------------------------

if __name__ == "__main__":
    # Small demo config consistent with the module's __init__ shapes
    # (input_fmt BZYXC, lateral/axial patch sizes). Dims are lane-dense and
    # head_dim = embed_dim / num_heads = 128 for full MXU/lane utilization.
    B, Z, Y, X, C = 2, 4, 32, 32, 2
    p_lat, p_ax = 8, 1
    num_patches = (Z // p_ax) * (Y // p_lat) * (X // p_lat)          # 64
    pixels_per_patch = p_ax * p_lat * p_lat * C                      # 128

    cfg = dict(
        p_lat=p_lat, p_ax=p_ax,
        num_patches=num_patches, pixels_per_patch=pixels_per_patch,
        embed_dim=256, dec_embed_dim=256,
        depth=2, dec_depth=1,
        num_heads=2, dec_num_heads=2,                                # head_dim = 128
        mlp_ratio=4.0, mask_ratio=0.75,
        init_std=0.02,
    )

    root = jax.random.PRNGKey(0)
    k_param, k_input, k_mask = jax.random.split(root, 3)

    params = init_params(k_param, cfg)
    inputs = jax.random.normal(k_input, (B, Z, Y, X, C), jnp.float32)

    loss = mae_forward(params, inputs, k_mask, cfg)
    loss = jax.block_until_ready(loss)
    assert loss.shape == () and jnp.isfinite(loss)
    print("KERNEL_OK")
</pallas_src>

<mosaic_0001>
module attributes {stable_mosaic.version = 11 : i64} {
  func.func @_embed_pos_kernel(%arg0: i32, %arg1: i32, %arg2: i32, %arg3: memref<1x64x128xf32, #tpu.memory_space<vmem>>, %arg4: memref<128x256xbf16, #tpu.memory_space<vmem>>, %arg5: memref<1x256xf32, #tpu.memory_space<vmem>>, %arg6: memref<64x256xbf16, #tpu.memory_space<vmem>>, %arg7: memref<1x64x256xbf16, #tpu.memory_space<vmem>>) attributes {dimension_semantics = [#tpu.dimension_semantics<parallel>, #tpu.dimension_semantics<parallel>, #tpu.dimension_semantics<parallel>], iteration_bounds = array<i64: 2, 1, 1>, scalar_prefetch = 0 : i64, scratch_operands = 0 : i64, tpu.core_type = #tpu.core_type<tc>, window_params = [{transform_indices = @transform_0, window_bounds = array<i64: 1, 64, 128>}, {transform_indices = @transform_1, window_bounds = array<i64: 128, 256>}, {transform_indices = @transform_2, window_bounds = array<i64: 1, 256>}, {transform_indices = @transform_3, window_bounds = array<i64: 64, 256>}, {transform_indices = @transform_4, window_bounds = array<i64: 1, 64, 256>}]} {
    %c0 = arith.constant 0 : index
    %c0_0 = arith.constant 0 : index
    %c0_1 = arith.constant 0 : index
    %0 = vector.load %arg3[%c0, %c0_0, %c0_1] : memref<1x64x128xf32, #tpu.memory_space<vmem>>, vector<1x64x128xf32>
    %1 = vector.shape_cast %0 : vector<1x64x128xf32> to vector<64x128xf32>
    %2 = arith.truncf %1 : vector<64x128xf32> to vector<64x128xbf16>
    %c0_2 = arith.constant 0 : index
    %c0_3 = arith.constant 0 : index
    %3 = vector.load %arg4[%c0_2, %c0_3] : memref<128x256xbf16, #tpu.memory_space<vmem>>, vector<128x256xbf16>
    %cst = arith.constant dense<0.000000e+00> : vector<64x256xf32>
    %4 = tpu.matmul %2, %3, %cst {dimension_numbers = #tpu.dot_dimension_numbers<[1], [0], [0], [1], [0, 0, 1, 1], [], []>} : vector<64x128xbf16>, vector<128x256xbf16>, vector<64x256xf32> -> vector<64x256xf32>
    %c0_4 = arith.constant 0 : index
    %c0_5 = arith.constant 0 : index
    %5 = vector.load %arg5[%c0_4, %c0_5] : memref<1x256xf32, #tpu.memory_space<vmem>>, vector<1x256xf32>
    %6 = vector.broadcast %5 : vector<1x256xf32> to vector<64x256xf32>
    %7 = arith.addf %4, %6 : vector<64x256xf32>
    %c0_6 = arith.constant 0 : index
    %c0_7 = arith.constant 0 : index
    %8 = vector.load %arg6[%c0_6, %c0_7] : memref<64x256xbf16, #tpu.memory_space<vmem>>, vector<64x256xbf16>
    %9 = arith.extf %8 : vector<64x256xbf16> to vector<64x256xf32>
    %10 = arith.addf %7, %9 : vector<64x256xf32>
    %11 = arith.truncf %10 : vector<64x256xf32> to vector<64x256xbf16>
    %c0_8 = arith.constant 0 : index
    %c0_9 = arith.constant 0 : index
    %c0_10 = arith.constant 0 : index
    %12 = vector.load %arg7[%c0_8, %c0_9, %c0_10] : memref<1x64x256xbf16, #tpu.memory_space<vmem>>, vector<1x64x256xbf16>
    %13 = vector.shape_cast %12 : vector<1x64x256xbf16> to vector<64x256xbf16>
    %14 = vector.shape_cast %11 : vector<64x256xbf16> to vector<1x64x256xbf16>
    tpu.vector_store %arg7[%c0_8, %c0_9, %c0_10], %14 {strides = array<i32>} : memref<1x64x256xbf16, #tpu.memory_space<vmem>>, vector<1x64x256xbf16>,
    return
  }
  func.func @transform_0(%arg0: i32, %arg1: i32, %arg2: i32) -> (i32, i32, i32) {
    %c0_i32 = arith.constant 0 : i32
    %c0_i32_0 = arith.constant 0 : i32
    return %arg0, %arg1, %c0_i32 : i32, i32, i32
  }
  func.func @transform_1(%arg0: i32, %arg1: i32, %arg2: i32) -> (i32, i32) {
    %c0_i32 = arith.constant 0 : i32
    %c0_i32_0 = arith.constant 0 : i32
    return %c0_i32, %arg2 : i32, i32
  }
  func.func @transform_2(%arg0: i32, %arg1: i32, %arg2: i32) -> (i32, i32) {
    %c0_i32 = arith.constant 0 : i32
    %c0_i32_0 = arith.constant 0 : i32
    return %c0_i32, %arg2 : i32, i32
  }
  func.func @transform_3(%arg0: i32, %arg1: i32, %arg2: i32) -> (i32, i32) {
    %c0_i32 = arith.constant 0 : i32
    return %arg1, %arg2 : i32, i32
  }
  func.func @transform_4(%arg0: i32, %arg1: i32, %arg2: i32) -> (i32, i32, i32) {
    %c0_i32 = arith.constant 0 : i32
    return %arg0, %arg1, %arg2 : i32, i32, i32
  }
}

</mosaic_0001>

<llo_original>
// kernel: tpu_custom_call.1
$region0: #{tpu_custom_call.1}
  #allocation0 [shape = 'u32[]', space=smem, size = 0x4, offset = 0x4, fixed_abs, tag = 'smem constant byte address 0x4 - core index']
  #allocation1 [shape = 'u32[144,128]{1,0:T(1,128)}', space=vmem, size = 0x12000, scoped, tag = 'internal scratch']
  %s0 = inlined_call_operand.hbm [shape: f32[2,64,128], index: 0, kind: input, shape index: {}]
  %s1 = inlined_call_operand.hbm [shape: bf16[128,256], index: 1, kind: input, shape index: {}]
  %s2 = inlined_call_operand.vmem [shape: f32[1,256], index: 2, kind: input, shape index: {}]
  %s3 = inlined_call_operand.hbm [shape: bf16[64,256], index: 3, kind: input, shape index: {}]
  %s4 = inlined_call_operand.hbm [shape: bf16[2,64,256], index: 4, kind: output, shape index: {}]
  %s5 = sld [smem:[#allocation0]]
  $region61: #{tpu_custom_call.1} parent=0
    _
  %s7 = ssub.s32 1, %s5
  %s8 = scalar_select 0, %s7, %s5
  $region1: #{tpu_custom_call.1} parent=0
    #allocation2 [shape = 'u8[65536]{0}', space=vmem, size = 0x10000, scoped, tag = 'input window, operand 0']
    #allocation3 [shape = 's32[2]{0}', space=sflag, size = 0x8, scoped, tag = 'scoped memory for tpu_custom_call.1']
    #allocation4 [shape = 's32[2]{0}', space=sflag, size = 0x8, scoped, tag = 'scoped memory for tpu_custom_call.1']
    #allocation5 [shape = 'u8[65536]{0}', space=vmem, size = 0x10000, scoped, tag = 'input window, operand 1, single buffered']
    #allocation6 [shape = 's32[1]{0}', space=sflag, size = 0x4, scoped, tag = 'scoped memory for tpu_custom_call.1']
    #allocation7 [shape = 'u8[32768]{0}', space=vmem, size = 0x8000, scoped, tag = 'input window, operand 3, single buffered']
    #allocation8 [shape = 'u8[65536]{0}', space=vmem, size = 0x10000, scoped, tag = 'output window, operand 0']
    %9 = vsyncpa [#allocation3], 0
    %s10 = scalar_lea.sflag [#allocation3], 1
    %11 = vsyncpa %s10, 0
    %12 = vsyncpa [#allocation6], 0
    %13 = vsyncpa [#allocation4], 0
    %s14 = scalar_lea.sflag [#allocation4], 1
    %15 = vsyncpa %s14, 0
    loop: start=0, step=1, limit=4
    $region2: #{tpu_custom_call.1} parent=1 // loop_pre_header
      _
    $region3: #{tpu_custom_call.1} parent=1 // loop_header
      %s17 = sphi 0, %s21
      %p18 = scmp.ge.s32.totalorder %s17, 4
      %s24 = sphi 0, %s43
      %s25 = sphi 0, %s39
      %s26 = sphi 0, %s35
      %s27 = sphi 0, %s24
      %s28 = sphi 0, %s25
      %s29 = sphi 0, %s26
      %s30 = sphi 0, %s27
      %s31 = sphi 0, %s28
      %s32 = sphi 0, %s29
      %s48 = sphi 0, %s50
      %s51 = sphi 0, %s48
      %s52 = sphi 0, %s51
      %s68 = sphi 0, %s52
      %s74 = sphi 0, %s76
      %s77 = sphi 0, %s74
      %s78 = sphi 0, %s77
      %s94 = sphi 0, %s78
      %s100 = sphi 0, %s102
      %s103 = sphi 0, %s100
      %s104 = sphi 0, %s103
      %s120 = sphi 0, %s104
      %s128 = sphi 0, %s130
      %s131 = sphi 0, %s128
      %s132 = sphi 0, %s131
      %s148 = sphi 0, %s132
      %s158 = sphi 0, %s160
      %s161 = sphi 0, %s158
      %s162 = sphi 0, %s161
      %s178 = sphi 0, %s162
    $region4: #{tpu_custom_call.1} parent=1 // loop_header_branch
      %20 = sbr.rel (%p18) target = $region8
    $region5: #{tpu_custom_call.1} parent=1 // loop_body
      %s22 = ssub.s32 %s17, 1
      %s23 = ssub.s32 %s17, 2
      %s33 = sadd.s32 1, %s26
      %p34 = scmp.ge.s32.totalorder %s33, 1
      %s35 = scalar_select %p34, 0, %s33
      %s36 = sadd.s32 1, %s25
      %s37 = scalar_select %p34, %s36, %s25
      %p38 = scmp.ge.s32.totalorder %s37, 1
      %s39 = scalar_select %p38, 0, %s37
      %s40 = sadd.s32 1, %s24
      %s41 = scalar_select %p38, %s40, %s24
      %p42 = scmp.ge.s32.totalorder %s41, 2
      %s43 = scalar_select %p42, 0, %s41
      %s44 = ssub.s32 %s24, %s43
      %s45 = ssub.s32 %s25, %s39
      %s46 = sor.u32 %s44, %s45
      %p47 = scmp.eq.s32.totalorder %s46, 0
      %s49 = sadd.s32 %s48, 1
      %s50 = scalar_select %p47, %s48, %s49
      %p53 = pneg %p47
      %p54 = scmp.eq.s32.totalorder %s17, 1
      %p55 = por %p53, %p54
      %p56 = scmp.ne.s32.totalorder %s48, %s51
      %p57 = scmp.eq.s32.totalorder %s17, 0
      %p58 = por %p56, %p57
      %p59 = scmp.ne.s32.totalorder %s48, %s51
      %p60 = scmp.eq.s32.totalorder %s22, 1
      %p61 = por %p59, %p60
      %p62 = scmp.ne.s32.totalorder %s51, %s52
      %p63 = scmp.eq.s32.totalorder %s22, 0
      %p64 = por %p62, %p63
      %p65 = scmp.ne.s32.totalorder %s51, %s52
      %p66 = scmp.eq.s32.totalorder %s23, 1
      %p67 = por %p65, %p66
      %p69 = scmp.ne.s32.totalorder %s52, %s68
      %p70 = scmp.eq.s32.totalorder %s23, 0
      %p71 = por %p69, %p70
      %s72 = ssub.s32 %s26, %s35
      %p73 = scmp.eq.s32.totalorder %s72, 0
      %s75 = sadd.s32 %s74, 1
      %s76 = scalar_select %p73, %s74, %s75
      %p79 = pneg %p73
      %p80 = scmp.eq.s32.totalorder %s17, 1
      %p81 = por %p79, %p80
      %p82 = scmp.ne.s32.totalorder %s74, %s77
      %p83 = scmp.eq.s32.totalorder %s17, 0
      %p84 = por %p82, %p83
      %p85 = scmp.ne.s32.totalorder %s74, %s77
      %p86 = scmp.eq.s32.totalorder %s22, 1
      %p87 = por %p85, %p86
      %p88 = scmp.ne.s32.totalorder %s77, %s78
      %p89 = scmp.eq.s32.totalorder %s22, 0
      %p90 = por %p88, %p89
      %p91 = scmp.ne.s32.totalorder %s77, %s78
      %p92 = scmp.eq.s32.totalorder %s23, 1
      %p93 = por %p91, %p92
      %p95 = scmp.ne.s32.totalorder %s78, %s94
      %p96 = scmp.eq.s32.totalorder %s23, 0
      %p97 = por %p95, %p96
      %s98 = ssub.s32 %s26, %s35
      %p99 = scmp.eq.s32.totalorder %s98, 0
      %s101 = sadd.s32 %s100, 1
      %s102 = scalar_select %p99, %s100, %s101
      %p105 = pneg %p99
      %p106 = scmp.eq.s32.totalorder %s17, 1
      %p107 = por %p105, %p106
      %p108 = scmp.ne.s32.totalorder %s100, %s103
      %p109 = scmp.eq.s32.totalorder %s17, 0
      %p110 = por %p108, %p109
      %p111 = scmp.ne.s32.totalorder %s100, %s103
      %p112 = scmp.eq.s32.totalorder %s22, 1
      %p113 = por %p111, %p112
      %p114 = scmp.ne.s32.totalorder %s103, %s104
      %p115 = scmp.eq.s32.totalorder %s22, 0
      %p116 = por %p114, %p115
      %p117 = scmp.ne.s32.totalorder %s103, %s104
      %p118 = scmp.eq.s32.totalorder %s23, 1
      %p119 = por %p117, %p118
      %p121 = scmp.ne.s32.totalorder %s104, %s120
      %p122 = scmp.eq.s32.totalorder %s23, 0
      %p123 = por %p121, %p122
      %s124 = ssub.s32 %s25, %s39
      %s125 = ssub.s32 %s26, %s35
      %s126 = sor.u32 %s124, %s125
      %p127 = scmp.eq.s32.totalorder %s126, 0
      %s129 = sadd.s32 %s128, 1
      %s130 = scalar_select %p127, %s128, %s129
      %p133 = pneg %p127
      %p134 = scmp.eq.s32.totalorder %s17, 1
      %p135 = por %p133, %p134
      %p136 = scmp.ne.s32.totalorder %s128, %s131
      %p137 = scmp.eq.s32.totalorder %s17, 0
      %p138 = por %p136, %p137
      %p139 = scmp.ne.s32.totalorder %s128, %s131
      %p140 = scmp.eq.s32.totalorder %s22, 1
      %p141 = por %p139, %p140
      %p142 = scmp.ne.s32.totalorder %s131, %s132
      %p143 = scmp.eq.s32.totalorder %s22, 0
      %p144 = por %p142, %p143
      %p145 = scmp.ne.s32.totalorder %s131, %s132
      %p146 = scmp.eq.s32.totalorder %s23, 1
      %p147 = por %p145, %p146
      %p149 = scmp.ne.s32.totalorder %s132, %s148
      %p150 = scmp.eq.s32.totalorder %s23, 0
      %p151 = por %p149, %p150
      %s152 = ssub.s32 %s24, %s43
      %s153 = ssub.s32 %s25, %s39
      %s154 = sor.u32 %s152, %s153
      %s155 = ssub.s32 %s26, %s35
      %s156 = sor.u32 %s154, %s155
      %p157 = scmp.eq.s32.totalorder %s156, 0
      %s159 = sadd.s32 %s158, 1
      %s160 = scalar_select %p157, %s158, %s159
      %p163 = pneg %p157
      %p164 = scmp.eq.s32.totalorder %s17, 1
      %p165 = por %p163, %p164
      %p166 = scmp.ne.s32.totalorder %s158, %s161
      %p167 = scmp.eq.s32.totalorder %s17, 0
      %p168 = por %p166, %p167
      %p169 = scmp.ne.s32.totalorder %s158, %s161
      %p170 = scmp.eq.s32.totalorder %s22, 1
      %p171 = por %p169, %p170
      %p172 = scmp.ne.s32.totalorder %s161, %s162
      %p173 = scmp.eq.s32.totalorder %s22, 0
      %p174 = por %p172, %p173
      %p175 = scmp.ne.s32.totalorder %s161, %s162
      %p176 = scmp.eq.s32.totalorder %s23, 1
      %p177 = por %p175, %p176
      %p179 = scmp.ne.s32.totalorder %s162, %s178
      %p180 = scmp.eq.s32.totalorder %s23, 0
      %p181 = por %p179, %p180
      %p182 = scmp.le.s32.totalorder 1, %s17
      %p183 = scmp.lt.s32.totalorder %s17, 3
      %p184 = pnand %p182, %p183
      %p185 = pneg %p184
      // Predicated region
      $region9: #{tpu_custom_call.1} parent=5 // pred_check
        _
      $region10: #{tpu_custom_call.1} parent=5 // pred_check_branch
        %187 = sbr.rel (%p184) target = $region12
      $region11: #{tpu_custom_call.1} parent=5 // pred_region
        %s188 = ssub.s32 %s17, 1
        // Predicated region
        $region13: #{tpu_custom_call.1} parent=11 // pred_check
          %p189 = pneg %p90
        $region14: #{tpu_custom_call.1} parent=11 // pred_check_branch
          %191 = sbr.rel (%p189) target = $region16
        $region15: #{tpu_custom_call.1} parent=11 // pred_region
          %s192 = smul.u32 2, %s29
          %s194 = ssub.s32 2048, 2048
          %195 = vsyncadd [#allocation6], %s194
          %s196 = smul.addr %s192, 64
          %s197 = scalar_lea.hbm %s1, %s196
          %s198 = sshll.u32 [#allocation5], 4
          %s199 = int_to_ptr.vmem [resolvable:$true] %s198
          %204 = dma.hbm_to_vmem [thread:$0]  %s197, 2048, %s199, [#allocation6], 128, 128, 8
        $region16: #{tpu_custom_call.1} parent=11 // pred_fallthru
          _
        // Predicated region
        $region17: #{tpu_custom_call.1} parent=11 // pred_check
          %p205 = pneg %p116
        $region18: #{tpu_custom_call.1} parent=11 // pred_check_branch
          %207 = sbr.rel (%p205) target = $region20
        $region19: #{tpu_custom_call.1} parent=11 // pred_region
          %s208 = smul.u32 2, %s29
          %p209 = scmp.lt.s32.totalorder %s208, 1
          %s210 = scalar_select %p209, %s208, 1
          %s211 = scalar_lea.vmem %s2, %s210
          %s212 = smul.u32 2, %s29
        $region20: #{tpu_custom_call.1} parent=11 // pred_fallthru
          _
        // Predicated region
        $region21: #{tpu_custom_call.1} parent=11 // pred_check
          %p213 = pneg %p144
        $region22: #{tpu_custom_call.1} parent=11 // pred_check_branch
          %215 = sbr.rel (%p213) target = $region24
        $region23: #{tpu_custom_call.1} parent=11 // pred_region
          %s216 = smul.u32 8, %s28
          %s217 = smul.u32 2, %s29
          %s219 = ssub.s32 1024, 1024
          %220 = vsyncadd [#allocation6], %s219
          %s221 = smul.addr %s216, 2
          %s222 = sadd.s32 %s217, %s221
          %s223 = smul.addr %s222, 64
          %s224 = scalar_lea.hbm %s3, %s223
          %s225 = sshll.u32 [#allocation7], 4
          %s226 = int_to_ptr.vmem [resolvable:$true] %s225
          %231 = dma.hbm_to_vmem [thread:$0]  %s224, 1024, %s226, [#allocation6], 128, 128, 8
        $region24: #{tpu_custom_call.1} parent=11 // pred_fallthru
          _
      $region12: #{tpu_custom_call.1} parent=5 // pred_fallthru
        _
      %p232 = scmp.lt.s32.totalorder %s17, 2
      // Predicated region
      $region25: #{tpu_custom_call.1} parent=5 // pred_check
        %p233 = pneg %p232
      $region26: #{tpu_custom_call.1} parent=5 // pred_check_branch
        %235 = sbr.rel (%p233) target = $region28
      $region27: #{tpu_custom_call.1} parent=5 // pred_region
        // Predicated region
        $region29: #{tpu_custom_call.1} parent=27 // pred_check
          %p236 = pneg %p58
        $region30: #{tpu_custom_call.1} parent=27 // pred_check_branch
          %238 = sbr.rel (%p236) target = $region32
        $region31: #{tpu_custom_call.1} parent=27 // pred_region
          %s239 = sand.u32 %s48, 1
          %s240 = scalar_lea.sflag [#allocation3], %s239
          %s241 = sand.u32 %s48, 1
          %s242 = smul.addr %s241, 64
          %s243 = scalar_lea.vmem [#allocation2], %s242
          %s244 = smul.u32 8, %s25
          %s246 = ssub.s32 1024, 1024
          %247 = vsyncadd %s240, %s246
          %s248 = smul.addr %s24, 8
          %s249 = sadd.s32 %s244, %s248
          %s250 = smul.addr %s249, 128
          %s251 = scalar_lea.hbm %s0, %s250
          %s252 = sshll.u32 %s243, 4
          %s253 = int_to_ptr.vmem [resolvable:$true] %s252
          %258 = dma.hbm_to_vmem [thread:$0]  %s251, 1024, %s253, %s240, 128, 128, 8
        $region32: #{tpu_custom_call.1} parent=27 // pred_fallthru
          _
      $region28: #{tpu_custom_call.1} parent=5 // pred_fallthru
        _
      %p259 = scmp.le.s32.totalorder 1, %s17
      %p260 = scmp.lt.s32.totalorder %s17, 3
      %p261 = pnand %p259, %p260
      %p262 = pneg %p261
      // Predicated region
      $region33: #{tpu_custom_call.1} parent=5 // pred_check
        _
      $region34: #{tpu_custom_call.1} parent=5 // pred_check_branch
        %264 = sbr.rel (%p261) target = $region36
      $region35: #{tpu_custom_call.1} parent=5 // pred_region
        %s265 = ssub.s32 %s17, 1
        %s266 = sand.u32 %s51, 1
        %s267 = scalar_lea.sflag [#allocation3], %s266
        %s268 = sand.u32 %s51, 1
        %s269 = smul.addr %s268, 64
        %s270 = scalar_lea.vmem [#allocation2], %s269
        // Predicated region
        $region37: #{tpu_custom_call.1} parent=35 // pred_check
          %p271 = pneg %p64
        $region38: #{tpu_custom_call.1} parent=35 // pred_check_branch
          %273 = sbr.rel (%p271) target = $region40
        $region39: #{tpu_custom_call.1} parent=35 // pred_region
          %274 = dma.done %s267, 1024
        $region40: #{tpu_custom_call.1} parent=35 // pred_fallthru
          _
        // Predicated region
        $region41: #{tpu_custom_call.1} parent=35 // pred_check
          %p275 = pneg %p90
        $region42: #{tpu_custom_call.1} parent=35 // pred_check_branch
          %277 = sbr.rel (%p275) target = $region44
        $region43: #{tpu_custom_call.1} parent=35 // pred_region
          %278 = dma.done [#allocation6], 2048
        $region44: #{tpu_custom_call.1} parent=35 // pred_fallthru
          _
        // Predicated region
        $region45: #{tpu_custom_call.1} parent=35 // pred_check
          %p279 = pneg %p144
        $region46: #{tpu_custom_call.1} parent=35 // pred_check_branch
          %281 = sbr.rel (%p279) target = $region48
        $region47: #{tpu_custom_call.1} parent=35 // pred_region
          %282 = dma.done [#allocation6], 1024
        $region48: #{tpu_custom_call.1} parent=35 // pred_fallthru
          _
        %s283 = sand.u32 %s51, 1
        %s284 = scalar_lea.sflag [#allocation3], %s283
        %s285 = sand.u32 %s51, 1
        %s286 = smul.addr %s285, 64
        %s287 = scalar_lea.vmem [#allocation2], %s286
        %p288 = pneg %p64
        %p289 = pneg %p61
        %p290 = pneg %p90
        %p291 = pneg %p87
        %s292 = smul.u32 2, %s29
        %p293 = scmp.lt.s32.totalorder %s292, 1
        %s294 = scalar_select %p293, %s292, 1
        %s295 = scalar_lea.vmem %s2, %s294
        %p296 = pneg %p116
        %p297 = pneg %p113
        %p298 = pneg %p144
        %p299 = pneg %p141
        %p300 = pneg %p174
        %p301 = pneg %p171
        %s302 = sand.u32 %s161, 1
        %s303 = scalar_lea.sflag [#allocation4], %s302
        %s304 = sand.u32 %s161, 1
        %s305 = smul.addr %s304, 64
        %s306 = scalar_lea.vmem [#allocation8], %s305
        %s307 = smul.u32 8, %s28
        %s308 = smul.u32 2, %s29
        %s309 = smul.u32 2, %s29
        %p310 = scmp.lt.s32.totalorder %s309, 1
        %s311 = scalar_select %p310, %s309, 1
        %s312 = scalar_lea.vmem %s2, %s311
        %s313 = smul.u32 2, %s29
        %s314 = smul.u32 8, %s28
        %s315 = smul.u32 2, %s29
        %s316 = smul.u32 8, %s28
        %s317 = smul.u32 2, %s29
        %v319 = vld [vmem:[%s270] sm:$0xff]
        %v320 = vld [vmem:[%s270 + $0x8] sm:$0xff]
        %v321 = vld [vmem:[%s270 + $0x10] sm:$0xff]
        %v322 = vld [vmem:[%s270 + $0x18] sm:$0xff]
        %v323 = vld [vmem:[%s270 + $0x20] sm:$0xff]
        %v324 = vld [vmem:[%s270 + $0x28] sm:$0xff]
        %v325 = vld [vmem:[%s270 + $0x30] sm:$0xff]
        %v326 = vld [vmem:[%s270 + $0x38] sm:$0xff]
        %v327 = vpack.c.bf16 %v320, %v319
        %v328 = vpack.c.bf16 %v322, %v321
        %v329 = vpack.c.bf16 %v324, %v323
        %v330 = vpack.c.bf16 %v326, %v325
        %v331 = vld [vmem:[#allocation5] sm:$0xff]
        %v332 = vld [vmem:[#allocation5 + $0x8] sm:$0xff]
        %v333 = vld [vmem:[#allocation5 + $0x10] sm:$0xff]
        %v334 = vld [vmem:[#allocation5 + $0x18] sm:$0xff]
        %v335 = vld [vmem:[#allocation5 + $0x20] sm:$0xff]
        %v336 = vld [vmem:[#allocation5 + $0x28] sm:$0xff]
        %v337 = vld [vmem:[#allocation5 + $0x30] sm:$0xff]
        %v338 = vld [vmem:[#allocation5 + $0x38] sm:$0xff]
        %v339 = vld [vmem:[#allocation5 + $0x40] sm:$0xff]
        %v340 = vld [vmem:[#allocation5 + $0x48] sm:$0xff]
        %v341 = vld [vmem:[#allocation5 + $0x50] sm:$0xff]
        %v342 = vld [vmem:[#allocation5 + $0x58] sm:$0xff]
        %v343 = vld [vmem:[#allocation5 + $0x60] sm:$0xff]
        %v344 = vld [vmem:[#allocation5 + $0x68] sm:$0xff]
        %v345 = vld [vmem:[#allocation5 + $0x70] sm:$0xff]
        %v346 = vld [vmem:[#allocation5 + $0x78] sm:$0xff]
        %v347 = vld [vmem:[%s312] sm:$0x3]
        %v349 = vlaneseq
        %v350 = vshrl.u32 %v349, 7
        %v351 = vsub.s32 0, %v350
        %v352 = vrot.slane %v347, %v351
        %v353 = vlaneseq
        %v354 = vshrl.u32 %v353, 7
        %v355 = vsub.s32 1, %v354
        %v356 = vrot.slane %v347, %v355
        %v375 = vunpack.c.l.b16 %v331
        %v376 = vunpack.c.h.b16 %v331
        %v377 = vunpack.c.l.b16 %v332
        %v378 = vunpack.c.h.b16 %v332
        %v379 = vunpack.c.l.b16 %v333
        %v380 = vunpack.c.h.b16 %v333
        %v381 = vunpack.c.l.b16 %v334
        %v382 = vunpack.c.h.b16 %v334
        %v383 = vunpack.c.l.b16 %v335
        %v384 = vunpack.c.h.b16 %v335
        %v385 = vunpack.c.l.b16 %v336
        %v386 = vunpack.c.h.b16 %v336
        %v387 = vunpack.c.l.b16 %v337
        %v388 = vunpack.c.h.b16 %v337
        %v389 = vunpack.c.l.b16 %v338
        %v390 = vunpack.c.h.b16 %v338
        %v391 = vunpack.c.l.b16 %v339
        %v392 = vunpack.c.h.b16 %v339
        %v393 = vunpack.c.l.b16 %v340
        %v394 = vunpack.c.h.b16 %v340
        %v395 = vunpack.c.l.b16 %v341
        %v396 = vunpack.c.h.b16 %v341
        %v397 = vunpack.c.l.b16 %v342
        %v398 = vunpack.c.h.b16 %v342
        %v399 = vunpack.c.l.b16 %v343
        %v400 = vunpack.c.h.b16 %v343
        %v401 = vunpack.c.l.b16 %v344
        %v402 = vunpack.c.h.b16 %v344
        %v403 = vunpack.c.l.b16 %v345
        %v404 = vunpack.c.h.b16 %v345
        %v405 = vunpack.c.l.b16 %v346
        %v406 = vunpack.c.h.b16 %v346
        %v407 = vpack.c.b16 %v377, %v375
        %v408 = vpack.c.b16 %v378, %v376
        %v409 = vpack.c.b16 %v381, %v379
        %v410 = vpack.c.b16 %v382, %v380
        %v411 = vpack.c.b16 %v385, %v383
        %v412 = vpack.c.b16 %v386, %v384
        %v413 = vpack.c.b16 %v389, %v387
        %v414 = vpack.c.b16 %v390, %v388
        %v415 = vpack.c.b16 %v393, %v391
        %v416 = vpack.c.b16 %v394, %v392
        %v417 = vpack.c.b16 %v397, %v395
        %v418 = vpack.c.b16 %v398, %v396
        %v419 = vpack.c.b16 %v401, %v399
        %v420 = vpack.c.b16 %v402, %v400
        %v421 = vpack.c.b16 %v405, %v403
        %v422 = vpack.c.b16 %v406, %v404
        %439 = vmatprep.subr.bf16.mxu0 %v408
        %440 = vmatpush1.bf16.msra.mxu0 %v407
        %441 = vmatprep.subr.bf16.mxu0 %v410
        %442 = vmatpush1.bf16.msra.mxu0 %v409
        %443 = vmatprep.subr.bf16.mxu0 %v412
        %444 = vmatpush1.bf16.msra.mxu0 %v411
        %445 = vmatprep.subr.bf16.mxu0 %v414
        %446 = vmatpush1.bf16.msra.mxu0 %v413
        %447 = vmatprep.subr.bf16.mxu0 %v416
        %448 = vmatpush1.bf16.msra.mxu0 %v415
        %449 = vmatprep.subr.bf16.mxu0 %v418
        %450 = vmatpush1.bf16.msra.mxu0 %v417
        %451 = vmatprep.subr.bf16.mxu0 %v420
        %452 = vmatpush1.bf16.msra.mxu0 %v419
        %453 = vmatprep.subr.bf16.mxu0 %v422
        %454 = vmatpush1.bf16.msra.mxu0 %v421
        %455 = vmatprep.subr.bf16.mxu0 0
        %456 = vmatpush1.bf16.msra.mxu0 0
        %457 = vmatprep.subr.bf16.mxu0 0
        %458 = vmatpush1.bf16.msra.mxu0 0
        %459 = vmatprep.subr.bf16.mxu0 0
        %460 = vmatpush1.bf16.msra.mxu0 0
        %461 = vmatprep.subr.bf16.mxu0 0
        %462 = vmatpush1.bf16.msra.mxu0 0
        %463 = vmatprep.subr.bf16.mxu0 0
        %464 = vmatpush1.bf16.msra.mxu0 0
        %465 = vmatprep.subr.bf16.mxu0 0
        %466 = vmatpush1.bf16.msra.mxu0 0
        %467 = vmatprep.subr.bf16.mxu0 0
        %468 = vmatpush1.bf16.msra.mxu0 0
        %469 = vmatprep.subr.bf16.mxu0 0
        %470 = vmatpush1.bf16.msra.mxu0 0
        %471 = vmatprep.mubr.bf16.mxu0 0
        %472 = vmatmul.mubr.bf16.gmra.mrb[0].mxu0 %v327
        %v473 = vpop.f32.mrb[0].mxu0
        %v474 = vadd.f32 %v352, %v473
        %v475 = vpop.f32.mrb[0].mxu0
        %v476 = vadd.f32 %v356, %v475
        %v477 = vpop.f32.mrb[0].mxu0
        %v478 = vadd.f32 %v352, %v477
        %v479 = vpop.f32.mrb[0].mxu0
        %v480 = vadd.f32 %v356, %v479
        %481 = vmatprep.mubr.bf16.mxu0 0
        %482 = vmatmul.mubr.bf16.gmra.mrb[0].mxu0 %v328
        %v483 = vpop.f32.mrb[0].mxu0
        %v484 = vadd.f32 %v352, %v483
        %v485 = vpop.f32.mrb[0].mxu0
        %v486 = vadd.f32 %v356, %v485
        %v487 = vpop.f32.mrb[0].mxu0
        %v488 = vadd.f32 %v352, %v487
        %v489 = vpop.f32.mrb[0].mxu0
        %v490 = vadd.f32 %v356, %v489
        %491 = vmatprep.mubr.bf16.mxu0 0
        %492 = vmatmul.mubr.bf16.gmra.mrb[0].mxu0 %v329
        %v493 = vpop.f32.mrb[0].mxu0
        %v494 = vadd.f32 %v352, %v493
        %v495 = vpop.f32.mrb[0].mxu0
        %v496 = vadd.f32 %v356, %v495
        %v497 = vpop.f32.mrb[0].mxu0
        %v498 = vadd.f32 %v352, %v497
        %v499 = vpop.f32.mrb[0].mxu0
        %v500 = vadd.f32 %v356, %v499
        %501 = vmatprep.mubr.bf16.mxu0 0
        %502 = vmatmul.mubr.bf16.gmra.mrb[0].mxu0 %v330
        %v503 = vpop.f32.mrb[0].mxu0
        %v504 = vadd.f32 %v352, %v503
        %v505 = vpop.f32.mrb[0].mxu0
        %v506 = vadd.f32 %v356, %v505
        %v507 = vpop.f32.mrb[0].mxu0
        %v508 = vadd.f32 %v352, %v507
        %v509 = vpop.f32.mrb[0].mxu0
        %v510 = vadd.f32 %v356, %v509
        %511 = vdwg.mxu0
        %v512 = vld [vmem:[#allocation7] sm:$0xff]
        %v513 = vld [vmem:[#allocation7 + $0x8] sm:$0xff]
        %v514 = vld [vmem:[#allocation7 + $0x10] sm:$0xff]
        %v515 = vld [vmem:[#allocation7 + $0x18] sm:$0xff]
        %v516 = vld [vmem:[#allocation7 + $0x20] sm:$0xff]
        %v517 = vld [vmem:[#allocation7 + $0x28] sm:$0xff]
        %v518 = vld [vmem:[#allocation7 + $0x30] sm:$0xff]
        %v519 = vld [vmem:[#allocation7 + $0x38] sm:$0xff]
        %v520 = vunpack.c.l.bf16 %v512
        %v521 = vunpack.c.h.bf16 %v512
        %v522 = vunpack.c.l.bf16 %v513
        %v523 = vunpack.c.h.bf16 %v513
        %v524 = vunpack.c.l.bf16 %v514
        %v525 = vunpack.c.h.bf16 %v514
        %v526 = vunpack.c.l.bf16 %v515
        %v527 = vunpack.c.h.bf16 %v515
        %v528 = vunpack.c.l.bf16 %v516
        %v529 = vunpack.c.h.bf16 %v516
        %v530 = vunpack.c.l.bf16 %v517
        %v531 = vunpack.c.h.bf16 %v517
        %v532 = vunpack.c.l.bf16 %v518
        %v533 = vunpack.c.h.bf16 %v518
        %v534 = vunpack.c.l.bf16 %v519
        %v535 = vunpack.c.h.bf16 %v519
        %v536 = vadd.f32 %v474, %v520
        %v537 = vadd.f32 %v476, %v521
        %v538 = vadd.f32 %v478, %v522
        %v539 = vadd.f32 %v480, %v523
        %v540 = vadd.f32 %v484, %v524
        %v541 = vadd.f32 %v486, %v525
        %v542 = vadd.f32 %v488, %v526
        %v543 = vadd.f32 %v490, %v527
        %v544 = vadd.f32 %v494, %v528
        %v545 = vadd.f32 %v496, %v529
        %v546 = vadd.f32 %v498, %v530
        %v547 = vadd.f32 %v500, %v531
        %v548 = vadd.f32 %v504, %v532
        %v549 = vadd.f32 %v506, %v533
        %v550 = vadd.f32 %v508, %v534
        %v551 = vadd.f32 %v510, %v535
        %v552 = vpack.c.bf16 %v538, %v536
        %v553 = vpack.c.bf16 %v539, %v537
        %v554 = vpack.c.bf16 %v542, %v540
        %v555 = vpack.c.bf16 %v543, %v541
        %v556 = vpack.c.bf16 %v546, %v544
        %v557 = vpack.c.bf16 %v547, %v545
        %v558 = vpack.c.bf16 %v550, %v548
        %v559 = vpack.c.bf16 %v551, %v549
        %v568 = vunpack.c.l.b16 %v552
        %v569 = vunpack.c.l.b16 %v553
        %v570 = vunpack.c.h.b16 %v552
        %v571 = vunpack.c.h.b16 %v553
        %v572 = vunpack.c.l.b16 %v554
        %v573 = vunpack.c.l.b16 %v555
        %v574 = vunpack.c.h.b16 %v554
        %v575 = vunpack.c.h.b16 %v555
        %v576 = vunpack.c.l.b16 %v556
        %v577 = vunpack.c.l.b16 %v557
        %v578 = vunpack.c.h.b16 %v556
        %v579 = vunpack.c.h.b16 %v557
        %v580 = vunpack.c.l.b16 %v558
        %v581 = vunpack.c.l.b16 %v559
        %v582 = vunpack.c.h.b16 %v558
        %v583 = vunpack.c.h.b16 %v559
        %v584 = vpack.c.b16 %v569, %v568
        %v585 = vpack.c.b16 %v571, %v570
        %v586 = vpack.c.b16 %v573, %v572
        %v587 = vpack.c.b16 %v575, %v574
        %v588 = vpack.c.b16 %v577, %v576
        %v589 = vpack.c.b16 %v579, %v578
        %v590 = vpack.c.b16 %v581, %v580
        %v591 = vpack.c.b16 %v583, %v582
        %600 = vst [vmem:[%s306] sm:$0xff] %v584
        %601 = vst [vmem:[%s306 + $0x8] sm:$0xff] %v585
        %602 = vst [vmem:[%s306 + $0x10] sm:$0xff] %v586
        %603 = vst [vmem:[%s306 + $0x18] sm:$0xff] %v587
        %604 = vst [vmem:[%s306 + $0x20] sm:$0xff] %v588
        %605 = vst [vmem:[%s306 + $0x28] sm:$0xff] %v589
        %606 = vst [vmem:[%s306 + $0x30] sm:$0xff] %v590
        %607 = vst [vmem:[%s306 + $0x38] sm:$0xff] %v591
        %s608 = sand.u32 %s161, 1
        %s609 = scalar_lea.sflag [#allocation4], %s608
        %s610 = sand.u32 %s161, 1
        %s611 = smul.addr %s610, 64
        %s612 = scalar_lea.vmem [#allocation8], %s611
        // Predicated region
        $region49: #{tpu_custom_call.1} parent=35 // pred_check
          %p613 = pneg %p171
        $region50: #{tpu_custom_call.1} parent=35 // pred_check_branch
          %615 = sbr.rel (%p613) target = $region52
        $region51: #{tpu_custom_call.1} parent=35 // pred_region
          %s616 = smul.u32 8, %s28
          %s617 = smul.u32 2, %s29
          %s619 = ssub.s32 1024, 1024
          %620 = vsyncadd %s609, %s619
          %s621 = smul.addr %s616, 2
          %s622 = sadd.s32 %s617, %s621
          %s623 = smul.addr %s27, 16
          %s624 = sadd.s32 %s622, %s623
          %s625 = smul.addr %s624, 64
          %s626 = scalar_lea.hbm %s4, %s625
          %s627 = sshll.u32 %s612, 4
          %s628 = int_to_ptr.vmem [resolvable:$true] %s627
          %633 = dma.vmem_to_hbm [thread:$0]  %s628, 1024, %s626, %s609, 128, 128, 8
        $region52: #{tpu_custom_call.1} parent=35 // pred_fallthru
          _
      $region36: #{tpu_custom_call.1} parent=5 // pred_fallthru
        _
      %p634 = scmp.le.s32.totalorder 2, %s17
      // Predicated region
      $region53: #{tpu_custom_call.1} parent=5 // pred_check
        %p635 = pneg %p634
      $region54: #{tpu_custom_call.1} parent=5 // pred_check_branch
        %637 = sbr.rel (%p635) target = $region56
      $region55: #{tpu_custom_call.1} parent=5 // pred_region
        %s638 = ssub.s32 %s17, 2
        // Predicated region
        $region57: #{tpu_custom_call.1} parent=55 // pred_check
          %p639 = pneg %p177
        $region58: #{tpu_custom_call.1} parent=55 // pred_check_branch
          %641 = sbr.rel (%p639) target = $region60
        $region59: #{tpu_custom_call.1} parent=55 // pred_region
          %s642 = sand.u32 %s162, 1
          %s643 = scalar_lea.sflag [#allocation4], %s642
          %s644 = sand.u32 %s162, 1
          %s645 = smul.addr %s644, 64
          %s646 = scalar_lea.vmem [#allocation8], %s645
          %647 = dma.done %s643, 1024
        $region60: #{tpu_custom_call.1} parent=55 // pred_fallthru
          _
      $region56: #{tpu_custom_call.1} parent=5 // pred_fallthru
        _
    $region6: #{tpu_custom_call.1} parent=1 // loop_footer
      %s21 = sadd.s32 1, %s17
    $region7: #{tpu_custom_call.1} parent=1 // loop_footer_branch
      %16 = sbr.rel target = $region3
    $region8: #{tpu_custom_call.1} parent=1 // loop_exit
      _
    %648 = vsyncpa [#allocation3], 1
    %s649 = scalar_lea.sflag [#allocation3], 1
    %650 = vsyncpa %s649, 1
    %651 = vsyncpa [#allocation6], 1
    %652 = vsyncpa [#allocation4], 1
    %s653 = scalar_lea.sflag [#allocation4], 1
    %654 = vsyncpa %s653, 1

</llo_original>
